<compile_context>
chip_gen: v5e
topology: v5e:2x2
jax: 0.10.0
libtpu: 0.0.40
codegen_flags: <defaults>
</compile_context>

<pallas_src>
import functools

import jax
import jax.numpy as jnp
from jax.experimental import pallas as pl
from jax.experimental.pallas import tpu as pltpu

N_HIDDEN = 128   # hidden width fixed by the module
LANE = 128       # TPU lane width; output feature dim is padded to this


def _round_up(x, m):
    return ((x + m - 1) // m) * m


def qnetwork_kernel(x_ref, w1_ref, b1_ref, w2_ref, b2_ref, w3_ref, b3_ref, o_ref):
    # x_ref: (TILE_B, n_state) bf16 ; weights bf16 ; biases (1, .) f32
    # o_ref: (TILE_B, LANE) f32
    x = x_ref[...]
    # Layer 1: MXU matmul with f32 accumulate; bias + ReLU on the VPU in f32.
    h1 = jnp.dot(x, w1_ref[...], preferred_element_type=jnp.float32) + b1_ref[...]
    h1 = jnp.maximum(h1, 0.0).astype(jnp.bfloat16)
    # Layer 2
    h2 = jnp.dot(h1, w2_ref[...], preferred_element_type=jnp.float32) + b2_ref[...]
    h2 = jnp.maximum(h2, 0.0).astype(jnp.bfloat16)
    # Layer 3 (output columns zero-padded to LANE -> unmasked lane-dense store)
    out = jnp.dot(h2, w3_ref[...], preferred_element_type=jnp.float32) + b3_ref[...]
    o_ref[...] = out.astype(o_ref.dtype)


@functools.partial(jax.jit, static_argnames=("n_action", "tile_b_cap"))
def qnetwork_forward(x, params, *, n_action, tile_b_cap=256):
    """Forward pass. x: (B, n_state) f32/bf16. Returns (B, n_action) f32."""
    w1, b1, w2, b2, w3p, b3p = params
    B, n_state = x.shape
    n_pad = w3p.shape[1]                       # = LANE (padded output width)

    # Pick an MXU-aligned batch tile that minimizes padding while keeping each
    # tile <= tile_b_cap rows (VMEM-friendly, and >1 tile lets v7x megacore split).
    num_tiles = pl.cdiv(B, tile_b_cap)
    TILE_B = _round_up(pl.cdiv(B, num_tiles), 8)
    B_pad = num_tiles * TILE_B
    if B_pad != B:
        x = jnp.pad(x, ((0, B_pad - B), (0, 0)))
    x = x.astype(jnp.bfloat16)

    out = pl.pallas_call(
        qnetwork_kernel,
        out_shape=jax.ShapeDtypeStruct((B_pad, n_pad), jnp.float32),
        grid_spec=pltpu.PrefetchScalarGridSpec(
            num_scalar_prefetch=0,
            grid=(num_tiles,),
            in_specs=[
                pl.BlockSpec((TILE_B, n_state), lambda i: (i, 0)),    # x: tiled over batch
                pl.BlockSpec((n_state, N_HIDDEN), lambda i: (0, 0)),  # w1: VMEM-resident
                pl.BlockSpec((1, N_HIDDEN), lambda i: (0, 0)),        # b1
                pl.BlockSpec((N_HIDDEN, N_HIDDEN), lambda i: (0, 0)), # w2
                pl.BlockSpec((1, N_HIDDEN), lambda i: (0, 0)),        # b2
                pl.BlockSpec((N_HIDDEN, n_pad), lambda i: (0, 0)),    # w3 (padded cols)
                pl.BlockSpec((1, n_pad), lambda i: (0, 0)),           # b3 (padded cols)
            ],
            out_specs=pl.BlockSpec((TILE_B, n_pad), lambda i: (i, 0)),
        ),
        compiler_params=pltpu.CompilerParams(
            dimension_semantics=("parallel",),
        ),
    )(x, w1, b1, w2, b2, w3p, b3p)

    # Drop batch padding and the zero-padded output columns.
    return out[:B, :n_action]


def init_params(key, n_state, n_action):
    """Deterministic init mimicking PyTorch nn.Linear default U(-1/sqrt(fan_in), +).

    Weights stored as (in_features, out_features) in bf16; biases as (1, out) f32.
    The final layer is zero-padded to LANE output columns for lane-dense stores.
    """
    def linear(key, fan_in, fan_out):
        kw, kb = jax.random.split(key)
        bound = 1.0 / jnp.sqrt(jnp.float32(fan_in))
        w = jax.random.uniform(kw, (fan_in, fan_out), jnp.float32, -bound, bound)
        b = jax.random.uniform(kb, (1, fan_out), jnp.float32, -bound, bound)
        return w, b

    k1, k2, k3 = jax.random.split(key, 3)
    w1, b1 = linear(k1, n_state, N_HIDDEN)
    w2, b2 = linear(k2, N_HIDDEN, N_HIDDEN)
    w3, b3 = linear(k3, N_HIDDEN, n_action)

    # Pad output features to a multiple of LANE with exact zeros.
    n_pad = max(LANE, _round_up(n_action, LANE))
    w3p = jnp.zeros((N_HIDDEN, n_pad), jnp.float32).at[:, :n_action].set(w3)
    b3p = jnp.zeros((1, n_pad), jnp.float32).at[:, :n_action].set(b3)

    return (w1.astype(jnp.bfloat16), b1,
            w2.astype(jnp.bfloat16), b2,
            w3p.astype(jnp.bfloat16), b3p)


def qnetwork_ref(x, params, n_action):
    """Pure-JAX reference mirroring the kernel's bf16-matmul / f32-accumulate math."""
    w1, b1, w2, b2, w3p, b3p = params
    xb = x.astype(jnp.bfloat16)
    h1 = jnp.dot(xb, w1, preferred_element_type=jnp.float32) + b1
    h1 = jnp.maximum(h1, 0.0).astype(jnp.bfloat16)
    h2 = jnp.dot(h1, w2, preferred_element_type=jnp.float32) + b2
    h2 = jnp.maximum(h2, 0.0).astype(jnp.bfloat16)
    out = jnp.dot(h2, w3p, preferred_element_type=jnp.float32) + b3p
    return out[:, :n_action]


if __name__ == "__main__":
    n_state, n_action = 4, 2   # CartPole-like dims

    key = jax.random.PRNGKey(0)
    kx, kp, kx2 = jax.random.split(key, 3)
    params = init_params(kp, n_state, n_action)

    # Small batch (single grid step).
    batch = 8
    x = jax.random.normal(kx, (batch, n_state), jnp.float32)
    out = jax.block_until_ready(qnetwork_forward(x, params, n_action=n_action))
    ref = qnetwork_ref(x, params, n_action)
    assert out.shape == (batch, n_action)
    assert jnp.allclose(out, ref, atol=5e-3, rtol=5e-3), "mismatch vs reference (small batch)"

    # Larger, non-multiple batch: exercises batch padding + multi-step parallel grid
    # (2 tiles of 152 rows -> only 4 padded rows).
    batch2 = 300
    x2 = jax.random.normal(kx2, (batch2, n_state), jnp.float32)
    out2 = jax.block_until_ready(
        qnetwork_forward(x2, params, n_action=n_action, tile_b_cap=256))
    ref2 = qnetwork_ref(x2, params, n_action)
    assert out2.shape == (batch2, n_action)
    assert jnp.allclose(out2, ref2, atol=5e-3, rtol=5e-3), "mismatch vs reference (tiled batch)"

    print("KERNEL_OK")
</pallas_src>

<mosaic_0001>
module attributes {stable_mosaic.version = 11 : i64} {
  func.func @qnetwork_kernel(%arg0: i32, %arg1: memref<8x4xbf16, #tpu.memory_space<vmem>>, %arg2: memref<4x128xbf16, #tpu.memory_space<vmem>>, %arg3: memref<1x128xf32, #tpu.memory_space<vmem>>, %arg4: memref<128x128xbf16, #tpu.memory_space<vmem>>, %arg5: memref<1x128xf32, #tpu.memory_space<vmem>>, %arg6: memref<128x128xbf16, #tpu.memory_space<vmem>>, %arg7: memref<1x128xf32, #tpu.memory_space<vmem>>, %arg8: memref<8x128xf32, #tpu.memory_space<vmem>>) attributes {dimension_semantics = [#tpu.dimension_semantics<parallel>], iteration_bounds = array<i64: 1>, scalar_prefetch = 0 : i64, scratch_operands = 0 : i64, tpu.core_type = #tpu.core_type<tc>, window_params = [{transform_indices = @transform_0, window_bounds = array<i64: 8, 4>}, {pipeline_mode = #tpu.pipeline_mode<synchronous>, transform_indices = @transform_1, window_bounds = array<i64: 4, 128>}, {pipeline_mode = #tpu.pipeline_mode<synchronous>, transform_indices = @transform_2, window_bounds = array<i64: 1, 128>}, {pipeline_mode = #tpu.pipeline_mode<synchronous>, transform_indices = @transform_3, window_bounds = array<i64: 128, 128>}, {pipeline_mode = #tpu.pipeline_mode<synchronous>, transform_indices = @transform_4, window_bounds = array<i64: 1, 128>}, {pipeline_mode = #tpu.pipeline_mode<synchronous>, transform_indices = @transform_5, window_bounds = array<i64: 128, 128>}, {pipeline_mode = #tpu.pipeline_mode<synchronous>, transform_indices = @transform_6, window_bounds = array<i64: 1, 128>}, {transform_indices = @transform_7, window_bounds = array<i64: 8, 128>}]} {
    %c0 = arith.constant 0 : index
    %c0_0 = arith.constant 0 : index
    %0 = vector.load %arg1[%c0, %c0_0] : memref<8x4xbf16, #tpu.memory_space<vmem>>, vector<8x4xbf16>
    %c0_1 = arith.constant 0 : index
    %c0_2 = arith.constant 0 : index
    %1 = vector.load %arg2[%c0_1, %c0_2] : memref<4x128xbf16, #tpu.memory_space<vmem>>, vector<4x128xbf16>
    %cst = arith.constant dense<0.000000e+00> : vector<8x128xf32>
    %2 = tpu.matmul %0, %1, %cst {dimension_numbers = #tpu.dot_dimension_numbers<[1], [0], [0], [1], [0, 0, 1, 1], [], []>} : vector<8x4xbf16>, vector<4x128xbf16>, vector<8x128xf32> -> vector<8x128xf32>
    %c0_3 = arith.constant 0 : index
    %c0_4 = arith.constant 0 : index
    %3 = vector.load %arg3[%c0_3, %c0_4] : memref<1x128xf32, #tpu.memory_space<vmem>>, vector<1x128xf32>
    %4 = vector.broadcast %3 : vector<1x128xf32> to vector<8x128xf32>
    %5 = arith.addf %2, %4 : vector<8x128xf32>
    %cst_5 = arith.constant 0.000000e+00 : f32
    %6 = vector.broadcast %cst_5 : f32 to vector<8x128xf32>
    %7 = arith.maximumf %5, %6 : vector<8x128xf32>
    %8 = arith.truncf %7 : vector<8x128xf32> to vector<8x128xbf16>
    %c0_6 = arith.constant 0 : index
    %c0_7 = arith.constant 0 : index
    %9 = vector.load %arg4[%c0_6, %c0_7] : memref<128x128xbf16, #tpu.memory_space<vmem>>, vector<128x128xbf16>
    %cst_8 = arith.constant dense<0.000000e+00> : vector<8x128xf32>
    %10 = tpu.matmul %8, %9, %cst_8 {dimension_numbers = #tpu.dot_dimension_numbers<[1], [0], [0], [1], [0, 0, 1, 1], [], []>} : vector<8x128xbf16>, vector<128x128xbf16>, vector<8x128xf32> -> vector<8x128xf32>
    %c0_9 = arith.constant 0 : index
    %c0_10 = arith.constant 0 : index
    %11 = vector.load %arg5[%c0_9, %c0_10] : memref<1x128xf32, #tpu.memory_space<vmem>>, vector<1x128xf32>
    %12 = vector.broadcast %11 : vector<1x128xf32> to vector<8x128xf32>
    %13 = arith.addf %10, %12 : vector<8x128xf32>
    %cst_11 = arith.constant 0.000000e+00 : f32
    %14 = vector.broadcast %cst_11 : f32 to vector<8x128xf32>
    %15 = arith.maximumf %13, %14 : vector<8x128xf32>
    %16 = arith.truncf %15 : vector<8x128xf32> to vector<8x128xbf16>
    %c0_12 = arith.constant 0 : index
    %c0_13 = arith.constant 0 : index
    %17 = vector.load %arg6[%c0_12, %c0_13] : memref<128x128xbf16, #tpu.memory_space<vmem>>, vector<128x128xbf16>
    %cst_14 = arith.constant dense<0.000000e+00> : vector<8x128xf32>
    %18 = tpu.matmul %16, %17, %cst_14 {dimension_numbers = #tpu.dot_dimension_numbers<[1], [0], [0], [1], [0, 0, 1, 1], [], []>} : vector<8x128xbf16>, vector<128x128xbf16>, vector<8x128xf32> -> vector<8x128xf32>
    %c0_15 = arith.constant 0 : index
    %c0_16 = arith.constant 0 : index
    %19 = vector.load %arg7[%c0_15, %c0_16] : memref<1x128xf32, #tpu.memory_space<vmem>>, vector<1x128xf32>
    %20 = vector.broadcast %19 : vector<1x128xf32> to vector<8x128xf32>
    %21 = arith.addf %18, %20 : vector<8x128xf32>
    %c0_17 = arith.constant 0 : index
    %c0_18 = arith.constant 0 : index
    %22 = vector.load %arg8[%c0_17, %c0_18] : memref<8x128xf32, #tpu.memory_space<vmem>>, vector<8x128xf32>
    tpu.vector_store %arg8[%c0_17, %c0_18], %21 {strides = array<i32>} : memref<8x128xf32, #tpu.memory_space<vmem>>, vector<8x128xf32>,
    return
  }
  func.func @transform_0(%arg0: i32) -> (i32, i32) {
    %c0_i32 = arith.constant 0 : i32
    %c0_i32_0 = arith.constant 0 : i32
    return %arg0, %c0_i32 : i32, i32
  }
  func.func @transform_1(%arg0: i32) -> (i32, i32) {
    %c0_i32 = arith.constant 0 : i32
    %c0_i32_0 = arith.constant 0 : i32
    %c0_i32_1 = arith.constant 0 : i32
    return %c0_i32, %c0_i32_0 : i32, i32
  }
  func.func @transform_2(%arg0: i32) -> (i32, i32) {
    %c0_i32 = arith.constant 0 : i32
    %c0_i32_0 = arith.constant 0 : i32
    %c0_i32_1 = arith.constant 0 : i32
    return %c0_i32, %c0_i32_0 : i32, i32
  }
  func.func @transform_3(%arg0: i32) -> (i32, i32) {
    %c0_i32 = arith.constant 0 : i32
    %c0_i32_0 = arith.constant 0 : i32
    %c0_i32_1 = arith.constant 0 : i32
    return %c0_i32, %c0_i32_0 : i32, i32
  }
  func.func @transform_4(%arg0: i32) -> (i32, i32) {
    %c0_i32 = arith.constant 0 : i32
    %c0_i32_0 = arith.constant 0 : i32
    %c0_i32_1 = arith.constant 0 : i32
    return %c0_i32, %c0_i32_0 : i32, i32
  }
  func.func @transform_5(%arg0: i32) -> (i32, i32) {
    %c0_i32 = arith.constant 0 : i32
    %c0_i32_0 = arith.constant 0 : i32
    %c0_i32_1 = arith.constant 0 : i32
    return %c0_i32, %c0_i32_0 : i32, i32
  }
  func.func @transform_6(%arg0: i32) -> (i32, i32) {
    %c0_i32 = arith.constant 0 : i32
    %c0_i32_0 = arith.constant 0 : i32
    %c0_i32_1 = arith.constant 0 : i32
    return %c0_i32, %c0_i32_0 : i32, i32
  }
  func.func @transform_7(%arg0: i32) -> (i32, i32) {
    %c0_i32 = arith.constant 0 : i32
    %c0_i32_0 = arith.constant 0 : i32
    return %arg0, %c0_i32 : i32, i32
  }
}

</mosaic_0001>

<llo_original>
// kernel: qnetwork_forward.1
$region0: #{qnetwork_forward.1}
  #allocation0 [shape = 'u32[]', space=smem, size = 0x4, offset = 0x4, fixed_abs, tag = 'smem constant byte address 0x4 - core index']
  #allocation1 [shape = 'u32[72,128]{1,0:T(1,128)}', space=vmem, size = 0x9000, scoped, tag = 'internal scratch']
  %s0 = inlined_call_operand.vmem [shape: bf16[8,4], index: 0, kind: input, shape index: {}]
  %s1 = inlined_call_operand.vmem [shape: bf16[4,128], index: 1, kind: input, shape index: {}]
  %s2 = inlined_call_operand.vmem [shape: f32[1,128], index: 2, kind: input, shape index: {}]
  %s3 = inlined_call_operand.hbm [shape: bf16[128,128], index: 3, kind: input, shape index: {}]
  %s4 = inlined_call_operand.vmem [shape: f32[1,128], index: 4, kind: input, shape index: {}]
  %s5 = inlined_call_operand.hbm [shape: bf16[128,128], index: 5, kind: input, shape index: {}]
  %s6 = inlined_call_operand.vmem [shape: f32[1,128], index: 6, kind: input, shape index: {}]
  %s7 = inlined_call_operand.vmem [shape: f32[8,128], index: 7, kind: output, shape index: {}]
  %s8 = sld [smem:[#allocation0]]
  $region46: #{qnetwork_forward.1} parent=0
    _
  %s10 = ssub.s32 1, %s8
  %s11 = scalar_select 0, %s10, %s8
  $region1: #{qnetwork_forward.1} parent=0
    #allocation2 [shape = 'u8[32768]{0}', space=vmem, size = 0x8000, scoped, tag = 'input window, operand 3, single buffered']
    #allocation3 [shape = 's32[1]{0}', space=sflag, size = 0x4, scoped, tag = 'scoped memory for qnetwork_forward.1']
    #allocation4 [shape = 'u8[32768]{0}', space=vmem, size = 0x8000, scoped, tag = 'input window, operand 5, single buffered']
    #allocation5 [shape = 's32[1]{0}', space=sflag, size = 0x4, scoped, tag = 'scoped memory for qnetwork_forward.1']
    %12 = vsyncpa [#allocation3], 0
    %13 = vsyncpa [#allocation5], 0
    // Predicated region
    $region2: #{qnetwork_forward.1} parent=1 // pred_check
      _
    $region3: #{qnetwork_forward.1} parent=1 // pred_check_branch
      %15 = sbr.rel (0) target = $region5
    $region4: #{qnetwork_forward.1} parent=1 // pred_region
      _
    $region5: #{qnetwork_forward.1} parent=1 // pred_fallthru
      _
    // Predicated region
    $region6: #{qnetwork_forward.1} parent=1 // pred_check
      _
    $region7: #{qnetwork_forward.1} parent=1 // pred_check_branch
      %17 = sbr.rel (0) target = $region9
    $region8: #{qnetwork_forward.1} parent=1 // pred_region
      _
    $region9: #{qnetwork_forward.1} parent=1 // pred_fallthru
      _
    // Predicated region
    $region10: #{qnetwork_forward.1} parent=1 // pred_check
      _
    $region11: #{qnetwork_forward.1} parent=1 // pred_check_branch
      %19 = sbr.rel (0) target = $region13
    $region12: #{qnetwork_forward.1} parent=1 // pred_region
      _
    $region13: #{qnetwork_forward.1} parent=1 // pred_fallthru
      _
    // Predicated region
    $region14: #{qnetwork_forward.1} parent=1 // pred_check
      _
    $region15: #{qnetwork_forward.1} parent=1 // pred_check_branch
      %21 = sbr.rel (0) target = $region17
    $region16: #{qnetwork_forward.1} parent=1 // pred_region
      %23 = vsyncadd [#allocation3], 0
      %s24 = sshll.u32 %s3, 4
      %s25 = int_to_ptr.hbm [resolvable:$true] %s24
      %s26 = sshll.u32 [#allocation2], 4
      %s27 = int_to_ptr.vmem [resolvable:$true] %s26
      %32 = dma.hbm_to_vmem [thread:$0]  %s25, 1024, %s27, [#allocation3], 64, 64, 4
    $region17: #{qnetwork_forward.1} parent=1 // pred_fallthru
      _
    // Predicated region
    $region18: #{qnetwork_forward.1} parent=1 // pred_check
      _
    $region19: #{qnetwork_forward.1} parent=1 // pred_check_branch
      %34 = sbr.rel (0) target = $region21
    $region20: #{qnetwork_forward.1} parent=1 // pred_region
      _
    $region21: #{qnetwork_forward.1} parent=1 // pred_fallthru
      _
    // Predicated region
    $region22: #{qnetwork_forward.1} parent=1 // pred_check
      _
    $region23: #{qnetwork_forward.1} parent=1 // pred_check_branch
      %36 = sbr.rel (0) target = $region25
    $region24: #{qnetwork_forward.1} parent=1 // pred_region
      %38 = vsyncadd [#allocation5], 0
      %s39 = sshll.u32 %s5, 4
      %s40 = int_to_ptr.hbm [resolvable:$true] %s39
      %s41 = sshll.u32 [#allocation4], 4
      %s42 = int_to_ptr.vmem [resolvable:$true] %s41
      %47 = dma.hbm_to_vmem [thread:$0]  %s40, 1024, %s42, [#allocation5], 64, 64, 4
    $region25: #{qnetwork_forward.1} parent=1 // pred_fallthru
      _
    // Predicated region
    $region26: #{qnetwork_forward.1} parent=1 // pred_check
      _
    $region27: #{qnetwork_forward.1} parent=1 // pred_check_branch
      %49 = sbr.rel (0) target = $region29
    $region28: #{qnetwork_forward.1} parent=1 // pred_region
      _
    $region29: #{qnetwork_forward.1} parent=1 // pred_fallthru
      _
    // Predicated region
    $region30: #{qnetwork_forward.1} parent=1 // pred_check
      _
    $region31: #{qnetwork_forward.1} parent=1 // pred_check_branch
      %51 = sbr.rel (0) target = $region33
    $region32: #{qnetwork_forward.1} parent=1 // pred_region
      %53 = dma.done [#allocation3], 1024
    $region33: #{qnetwork_forward.1} parent=1 // pred_fallthru
      _
    // Predicated region
    $region34: #{qnetwork_forward.1} parent=1 // pred_check
      _
    $region35: #{qnetwork_forward.1} parent=1 // pred_check_branch
      %55 = sbr.rel (0) target = $region37
    $region36: #{qnetwork_forward.1} parent=1 // pred_region
      %57 = dma.done [#allocation5], 1024
    $region37: #{qnetwork_forward.1} parent=1 // pred_fallthru
      _
    %v59 = vld [vmem:[%s0] sm:$0xf]
    %v60 = vld [vmem:[%s1] sm:$0x3]
    %v61 = vld [vmem:[%s2] sm:$0x1]
    %v63 = vperm.slane %v61, 0
    %vm65 = vcmask 31744
    %v67 = vsel %vm65, %v59, 0
    %vm69 = vcmask 1041408
    %v71 = vsel %vm69, %v60, 0
    %73 = vmatpush.bf16.msra.mxu0 0
    %74 = vmatpush.bf16.msra.mxu0 0
    %75 = vmatpush.bf16.msra.mxu0 0
    %76 = vmatpush.bf16.msra.mxu0 0
    %77 = vmatpush.bf16.msra.mxu0 0
    %78 = vmatpush.bf16.msra.mxu0 0
    %79 = vmatpush.bf16.msra.mxu0 0
    %80 = vmatpush.bf16.msra.mxu0 %v71
    %81 = vmatmul.bf16.gmra.mxu0 %v67
    %v82 = vpop.f32.mrf.mxu0
    %v83 = vadd.f32 %v63, %v82
    %v84 = vpop.f32.mrf.mxu0
    %85 = vdwg.mxu0
    %v86 = vmax.f32 %v83, 0.0
    %v87 = vpack.c.bf16 %v86, %v86
    %v88 = vld [vmem:[#allocation2] sm:$0xf]
    %v89 = vld [vmem:[#allocation2 + $0x4] sm:$0xf]
    %v90 = vld [vmem:[#allocation2 + $0x8] sm:$0xf]
    %v91 = vld [vmem:[#allocation2 + $0xc] sm:$0xf]
    %v92 = vld [vmem:[#allocation2 + $0x10] sm:$0xf]
    %v93 = vld [vmem:[#allocation2 + $0x14] sm:$0xf]
    %v94 = vld [vmem:[#allocation2 + $0x18] sm:$0xf]
    %v95 = vld [vmem:[#allocation2 + $0x1c] sm:$0xf]
    %v96 = vld [vmem:[#allocation2 + $0x20] sm:$0xf]
    %v97 = vld [vmem:[#allocation2 + $0x24] sm:$0xf]
    %v98 = vld [vmem:[#allocation2 + $0x28] sm:$0xf]
    %v99 = vld [vmem:[#allocation2 + $0x2c] sm:$0xf]
    %v100 = vld [vmem:[#allocation2 + $0x30] sm:$0xf]
    %v101 = vld [vmem:[#allocation2 + $0x34] sm:$0xf]
    %v102 = vld [vmem:[#allocation2 + $0x38] sm:$0xf]
    %v103 = vld [vmem:[#allocation2 + $0x3c] sm:$0xf]
    %v104 = vld [vmem:[%s4] sm:$0x1]
    %v106 = vperm.slane %v104, 0
    %v124 = vunpack.c.l.b16 %v88
    %v125 = vunpack.c.l.b16 %v89
    %v126 = vunpack.c.l.b16 %v90
    %v127 = vunpack.c.l.b16 %v91
    %v128 = vunpack.c.l.b16 %v92
    %v129 = vunpack.c.l.b16 %v93
    %v130 = vunpack.c.l.b16 %v94
    %v131 = vunpack.c.l.b16 %v95
    %v132 = vunpack.c.l.b16 %v96
    %v133 = vunpack.c.l.b16 %v97
    %v134 = vunpack.c.l.b16 %v98
    %v135 = vunpack.c.l.b16 %v99
    %v136 = vunpack.c.l.b16 %v100
    %v137 = vunpack.c.l.b16 %v101
    %v138 = vunpack.c.l.b16 %v102
    %v139 = vunpack.c.l.b16 %v103
    %v140 = vpack.c.b16 %v125, %v124
    %v141 = vpack.c.b16 %v127, %v126
    %v142 = vpack.c.b16 %v129, %v128
    %v143 = vpack.c.b16 %v131, %v130
    %v144 = vpack.c.b16 %v133, %v132
    %v145 = vpack.c.b16 %v135, %v134
    %v146 = vpack.c.b16 %v137, %v136
    %v147 = vpack.c.b16 %v139, %v138
    %156 = vmatpush.bf16.msra.mxu0 %v147
    %157 = vmatpush.bf16.msra.mxu0 %v146
    %158 = vmatpush.bf16.msra.mxu0 %v145
    %159 = vmatpush.bf16.msra.mxu0 %v144
    %160 = vmatpush.bf16.msra.mxu0 %v143
    %161 = vmatpush.bf16.msra.mxu0 %v142
    %162 = vmatpush.bf16.msra.mxu0 %v141
    %163 = vmatpush.bf16.msra.mxu0 %v140
    %164 = vmatmul.bf16.gmra.mxu0 %v87
    %v165 = vpop.f32.mrf.mxu0
    %v166 = vadd.f32 %v106, %v165
    %v167 = vpop.f32.mrf.mxu0
    %168 = vdwg.mxu0
    %v169 = vmax.f32 %v166, 0.0
    %v170 = vpack.c.bf16 %v169, %v169
    %v171 = vld [vmem:[#allocation4] sm:$0xf]
    %v172 = vld [vmem:[#allocation4 + $0x4] sm:$0xf]
    %v173 = vld [vmem:[#allocation4 + $0x8] sm:$0xf]
    %v174 = vld [vmem:[#allocation4 + $0xc] sm:$0xf]
    %v175 = vld [vmem:[#allocation4 + $0x10] sm:$0xf]
    %v176 = vld [vmem:[#allocation4 + $0x14] sm:$0xf]
    %v177 = vld [vmem:[#allocation4 + $0x18] sm:$0xf]
    %v178 = vld [vmem:[#allocation4 + $0x1c] sm:$0xf]
    %v179 = vld [vmem:[#allocation4 + $0x20] sm:$0xf]
    %v180 = vld [vmem:[#allocation4 + $0x24] sm:$0xf]
    %v181 = vld [vmem:[#allocation4 + $0x28] sm:$0xf]
    %v182 = vld [vmem:[#allocation4 + $0x2c] sm:$0xf]
    %v183 = vld [vmem:[#allocation4 + $0x30] sm:$0xf]
    %v184 = vld [vmem:[#allocation4 + $0x34] sm:$0xf]
    %v185 = vld [vmem:[#allocation4 + $0x38] sm:$0xf]
    %v186 = vld [vmem:[#allocation4 + $0x3c] sm:$0xf]
    %v187 = vld [vmem:[%s6] sm:$0x1]
    %v189 = vperm.slane %v187, 0
    %v207 = vunpack.c.l.b16 %v171
    %v208 = vunpack.c.l.b16 %v172
    %v209 = vunpack.c.l.b16 %v173
    %v210 = vunpack.c.l.b16 %v174
    %v211 = vunpack.c.l.b16 %v175
    %v212 = vunpack.c.l.b16 %v176
    %v213 = vunpack.c.l.b16 %v177
    %v214 = vunpack.c.l.b16 %v178
    %v215 = vunpack.c.l.b16 %v179
    %v216 = vunpack.c.l.b16 %v180
    %v217 = vunpack.c.l.b16 %v181
    %v218 = vunpack.c.l.b16 %v182
    %v219 = vunpack.c.l.b16 %v183
    %v220 = vunpack.c.l.b16 %v184
    %v221 = vunpack.c.l.b16 %v185
    %v222 = vunpack.c.l.b16 %v186
    %v223 = vpack.c.b16 %v208, %v207
    %v224 = vpack.c.b16 %v210, %v209
    %v225 = vpack.c.b16 %v212, %v211
    %v226 = vpack.c.b16 %v214, %v213
    %v227 = vpack.c.b16 %v216, %v215
    %v228 = vpack.c.b16 %v218, %v217
    %v229 = vpack.c.b16 %v220, %v219
    %v230 = vpack.c.b16 %v222, %v221
    %239 = vmatpush.bf16.msra.mxu0 %v230
    %240 = vmatpush.bf16.msra.mxu0 %v229
    %241 = vmatpush.bf16.msra.mxu0 %v228
    %242 = vmatpush.bf16.msra.mxu0 %v227
    %243 = vmatpush.bf16.msra.mxu0 %v226
    %244 = vmatpush.bf16.msra.mxu0 %v225
    %245 = vmatpush.bf16.msra.mxu0 %v224
    %246 = vmatpush.bf16.msra.mxu0 %v223
    %247 = vmatmul.bf16.gmra.mxu0 %v170
    %v248 = vpop.f32.mrf.mxu0
    %v249 = vadd.f32 %v189, %v248
    %v250 = vpop.f32.mrf.mxu0
    %251 = vdwg.mxu0
    %252 = vst [vmem:[%s7] sm:$0xff] %v249
    // Predicated region
    $region38: #{qnetwork_forward.1} parent=1 // pred_check
      _
    $region39: #{qnetwork_forward.1} parent=1 // pred_check_branch
      %254 = sbr.rel (0) target = $region41
    $region40: #{qnetwork_forward.1} parent=1 // pred_region
      _
    $region41: #{qnetwork_forward.1} parent=1 // pred_fallthru
      _
    // Predicated region
    $region42: #{qnetwork_forward.1} parent=1 // pred_check
      _
    $region43: #{qnetwork_forward.1} parent=1 // pred_check_branch
      %256 = sbr.rel (0) target = $region45
    $region44: #{qnetwork_forward.1} parent=1 // pred_region
      _
    $region45: #{qnetwork_forward.1} parent=1 // pred_fallthru
      _
    %257 = vsyncpa [#allocation3], 1
    %258 = vsyncpa [#allocation5], 1

</llo_original>
